<compile_context>
chip_gen: v7x
topology: tpu7x:2x2x1
jax: 0.10.0
libtpu: 0.0.40
codegen_flags: <defaults>
</compile_context>

<pallas_src>
import functools

import jax
import jax.numpy as jnp
from jax.experimental import pallas as pl
from jax.experimental.pallas import tpu as pltpu


def _round_up(a, b):
    return ((a + b - 1) // b) * b


def _same_pad(k):
    # Matches Conv2DSamePadding's nn.ZeroPad2d amounts:
    #   (k // 2 + (k - 2 * (k // 2)) - 1, k // 2)  ==  (ceil(k/2) - 1, floor(k/2))
    return (k // 2 + (k % 2) - 1, k // 2)


def _conv_gemm_kernel(w_ref, x_ref, o_ref, *, activation):
    """One lane-dense output tile per grid step.

    w_ref: (Co, K+1)   weights with bias folded in as last column (resident)
    x_ref: (K+1, TM)   transposed im2col columns for this pixel tile
    o_ref: (Co, TM)    output tile (last dim is a multiple of 128)
    """
    y = jnp.dot(w_ref[...], x_ref[...], preferred_element_type=jnp.float32)
    if activation is not None:
        y = activation(y)
    o_ref[...] = y.astype(o_ref.dtype)


def conv2d_same_padding_pallas(x, weight, bias, *, stride=(1, 1),
                               activation=None, compute_dtype=None,
                               block_m=None):
    """Conv2DSamePadding forward: NCHW in -> NCHW out (torch semantics)."""
    N, Ci, H, W = x.shape
    Co, Ci_w, Kh, Kw = weight.shape
    assert Ci == Ci_w, "in_channels mismatch"
    sh, sw = stride

    # Asymmetric "same" zero padding (exactly the module's ZeroPad2d), applied
    # to a channel-major view so the im2col taps below need no further
    # transposes of replicated data.
    ph0, ph1 = _same_pad(Kh)
    pw0, pw1 = _same_pad(Kw)
    x_cm = jnp.transpose(x, (1, 0, 2, 3))                       # (Ci, N, H, W)
    x_cm = jnp.pad(x_cm, ((0, 0), (0, 0), (ph0, ph1), (pw0, pw1)))
    Hp, Wp = H + ph0 + ph1, W + pw0 + pw1
    Ho = (Hp - Kh) // sh + 1
    Wo = (Wp - Kw) // sw + 1

    T = Kh * Kw
    K = Ci * T
    M = N * Ho * Wo

    # Transposed im2col, tap-major / channel-minor rows, (n, ho, wo) columns.
    # Single concatenate (taps + ones-row for the bias) => one materialization.
    rows = []
    for kh in range(Kh):
        for kw in range(Kw):
            tap = x_cm[:, :,
                       kh:kh + (Ho - 1) * sh + 1:sh,
                       kw:kw + (Wo - 1) * sw + 1:sw]            # (Ci, N, Ho, Wo)
            rows.append(tap.reshape(Ci, M))
    rows.append(jnp.ones((1, M), x.dtype))
    xt = jnp.concatenate(rows, axis=0)                          # (K+1, M)

    # Weights re-ordered to match the tap-major rows, bias folded as a column.
    w_mat = jnp.concatenate(
        [jnp.transpose(weight, (0, 2, 3, 1)).reshape(Co, K).astype(x.dtype),
         bias.reshape(Co, 1).astype(x.dtype)],
        axis=1)                                                 # (Co, K+1)
    K1 = K + 1

    if compute_dtype is not None:            # e.g. jnp.bfloat16 on v6e/v7x
        xt = xt.astype(compute_dtype)
        w_mat = w_mat.astype(compute_dtype)

    # Tile the pixel axis: lane-dense (multiple of 128) tiles sized so the
    # double-buffered (K1, TM) input + (Co, TM) output stay a few MiB.
    itemsize = jnp.dtype(xt.dtype).itemsize
    if block_m is None:
        budget = 4 * 1024 * 1024
        bm = budget // (itemsize * (K1 + Co))
        block_m = min(max(128, (bm // 128) * 128), 8192)
    block_m = max(128, (block_m // 128) * 128)                  # keep lane-dense
    tm = min(block_m, _round_up(M, 128))
    m_pad = _round_up(M, tm)
    if m_pad != M:
        xt = jnp.pad(xt, ((0, 0), (0, m_pad - M)))

    kernel = functools.partial(_conv_gemm_kernel, activation=activation)
    out2d = pl.pallas_call(
        kernel,
        out_shape=jax.ShapeDtypeStruct((Co, m_pad), x.dtype),
        grid_spec=pltpu.PrefetchScalarGridSpec(
            num_scalar_prefetch=0,
            grid=(m_pad // tm,),
            in_specs=[
                pl.BlockSpec((Co, K1), lambda i: (0, 0)),   # weights+bias (resident)
                pl.BlockSpec((K1, tm), lambda i: (0, i)),   # im2col columns
            ],
            out_specs=pl.BlockSpec((Co, tm), lambda i: (0, i)),
        ),
        compiler_params=pltpu.CompilerParams(
            dimension_semantics=("parallel",),
            vmem_limit_bytes=32 * 1024 * 1024,
        ),
    )(w_mat, xt)

    y = out2d[:, :M].reshape(Co, N, Ho, Wo)
    return jnp.transpose(y, (1, 0, 2, 3))    # back to NCHW


if __name__ == "__main__":
    key = jax.random.PRNGKey(0)
    kx, kw1, kb, kx2, kw2 = jax.random.split(key, 5)

    in_channels, out_channels = 4, 8
    N, H, W = 2, 16, 16
    ksize = (2, 2)

    x = jax.random.normal(kx, (N, in_channels, H, W), jnp.float32)
    fan_in = in_channels * ksize[0] * ksize[1]
    bound = 1.0 / (fan_in ** 0.5)
    weight = jax.random.uniform(kw1, (out_channels, in_channels) + ksize,
                                jnp.float32, -bound, bound)
    bias = jax.random.uniform(kb, (out_channels,), jnp.float32, -bound, bound)

    def ref_conv(a, w, b, stride, act=None):
        kh, kw = w.shape[2], w.shape[3]
        ph = _same_pad(kh)
        pw = _same_pad(kw)
        ap = jnp.pad(a, ((0, 0), (0, 0), ph, pw))
        out = jax.lax.conv_general_dilated(
            ap, w, window_strides=stride, padding="VALID",
            dimension_numbers=("NCHW", "OIHW", "NCHW"),
        ) + b[None, :, None, None]
        return act(out) if act is not None else out

    # 1) Module defaults: kernel (2,2), stride (1,1), activation=None ("same" size out).
    y = jax.jit(lambda a, w, b: conv2d_same_padding_pallas(a, w, b))(x, weight, bias)
    y = jax.block_until_ready(y)
    y_ref = ref_conv(x, weight, bias, (1, 1))
    assert y.shape == (N, out_channels, H, W)
    assert jnp.allclose(y, y_ref, atol=1e-3, rtol=1e-3)

    # 2) LeakyReLU(0.2) activation path.
    act = lambda t: jax.nn.leaky_relu(t, negative_slope=0.2)
    y2 = jax.jit(lambda a, w, b: conv2d_same_padding_pallas(a, w, b, activation=act))(
        x, weight, bias)
    y2 = jax.block_until_ready(y2)
    assert jnp.allclose(y2, ref_conv(x, weight, bias, (1, 1), act), atol=1e-3, rtol=1e-3)

    # 3) Odd kernel (3,3), stride (2,2), pixel count not a multiple of 128
    #    (exercises the lane-padding / slicing path).
    H2 = W2 = 13
    x2 = jax.random.normal(kx2, (N, in_channels, H2, W2), jnp.float32)
    w2 = jax.random.uniform(kw2, (out_channels, in_channels, 3, 3),
                            jnp.float32, -bound, bound)
    y3 = jax.jit(lambda a, w, b: conv2d_same_padding_pallas(a, w, b, stride=(2, 2)))(
        x2, w2, bias)
    y3 = jax.block_until_ready(y3)
    y3_ref = ref_conv(x2, w2, bias, (2, 2))
    assert y3.shape == y3_ref.shape == (N, out_channels, 7, 7)
    assert jnp.allclose(y3, y3_ref, atol=1e-3, rtol=1e-3)

    print("KERNEL_OK")
</pallas_src>

<mosaic_0001>
module attributes {stable_mosaic.version = 11 : i64} {
  func.func @_conv_gemm_kernel(%arg0: i32, %arg1: memref<8x17xf32, #tpu.memory_space<vmem>>, %arg2: memref<17x512xf32, #tpu.memory_space<vmem>>, %arg3: memref<8x512xf32, #tpu.memory_space<vmem>>) attributes {dimension_semantics = [#tpu.dimension_semantics<parallel>], iteration_bounds = array<i64: 1>, scalar_prefetch = 0 : i64, scratch_operands = 0 : i64, tpu.core_type = #tpu.core_type<tc>, window_params = [{pipeline_mode = #tpu.pipeline_mode<synchronous>, transform_indices = @transform_0, window_bounds = array<i64: 8, 17>}, {transform_indices = @transform_1, window_bounds = array<i64: 17, 512>}, {transform_indices = @transform_2, window_bounds = array<i64: 8, 512>}]} {
    %c0 = arith.constant 0 : index
    %c0_0 = arith.constant 0 : index
    %0 = vector.load %arg1[%c0, %c0_0] : memref<8x17xf32, #tpu.memory_space<vmem>>, vector<8x17xf32>
    %c0_1 = arith.constant 0 : index
    %c0_2 = arith.constant 0 : index
    %1 = vector.load %arg2[%c0_1, %c0_2] : memref<17x512xf32, #tpu.memory_space<vmem>>, vector<17x512xf32>
    %cst = arith.constant dense<0.000000e+00> : vector<8x512xf32>
    %2 = tpu.matmul %0, %1, %cst {dimension_numbers = #tpu.dot_dimension_numbers<[1], [0], [0], [1], [0, 0, 1, 1], [], []>} : vector<8x17xf32>, vector<17x512xf32>, vector<8x512xf32> -> vector<8x512xf32>
    %c0_3 = arith.constant 0 : index
    %c0_4 = arith.constant 0 : index
    %3 = vector.load %arg3[%c0_3, %c0_4] : memref<8x512xf32, #tpu.memory_space<vmem>>, vector<8x512xf32>
    tpu.vector_store %arg3[%c0_3, %c0_4], %2 {strides = array<i32>} : memref<8x512xf32, #tpu.memory_space<vmem>>, vector<8x512xf32>,
    return
  }
  func.func @transform_0(%arg0: i32) -> (i32, i32) {
    %c0_i32 = arith.constant 0 : i32
    %c0_i32_0 = arith.constant 0 : i32
    %c0_i32_1 = arith.constant 0 : i32
    return %c0_i32, %c0_i32_0 : i32, i32
  }
  func.func @transform_1(%arg0: i32) -> (i32, i32) {
    %c0_i32 = arith.constant 0 : i32
    %c0_i32_0 = arith.constant 0 : i32
    return %c0_i32, %arg0 : i32, i32
  }
  func.func @transform_2(%arg0: i32) -> (i32, i32) {
    %c0_i32 = arith.constant 0 : i32
    %c0_i32_0 = arith.constant 0 : i32
    return %c0_i32, %arg0 : i32, i32
  }
}

</mosaic_0001>

<llo_original>
// kernel: _lambda_.1
$region0: #{_lambda_.1}
  #allocation0 [shape = 'u32[]', space=smem, size = 0x4, offset = 0x4, fixed_abs, tag = 'smem constant byte address 0x4 - core index']
  #allocation1 [shape = 'u32[144,128]{1,0:T(1,128)}', space=vmem, size = 0x12000, scoped, tag = 'internal scratch']
  %s0 = inlined_call_operand.vmem [shape: f32[8,17], index: 0, kind: input, shape index: {}]
  %s1 = inlined_call_operand.vmem [shape: f32[17,512], index: 1, kind: input, shape index: {}]
  %s2 = inlined_call_operand.vmem [shape: f32[8,512], index: 2, kind: output, shape index: {}]
  %s3 = sld [smem:[#allocation0]]
  $region18: #{_lambda_.1} parent=0
    _
  %s5 = ssub.s32 1, %s3
  %s6 = scalar_select 0, %s5, %s3
  // Predicated region
  $region2: #{_lambda_.1} parent=0 // pred_check
    _
  $region3: #{_lambda_.1} parent=0 // pred_check_branch
    %8 = sbr.rel (0) target = $region5
  $region4: #{_lambda_.1} parent=0 // pred_region
    _
  $region5: #{_lambda_.1} parent=0 // pred_fallthru
    _
  // Predicated region
  $region6: #{_lambda_.1} parent=0 // pred_check
    _
  $region7: #{_lambda_.1} parent=0 // pred_check_branch
    %10 = sbr.rel (0) target = $region9
  $region8: #{_lambda_.1} parent=0 // pred_region
    _
  $region9: #{_lambda_.1} parent=0 // pred_fallthru
    _
  %v11 = vld [vmem:[%s0] sm:$0xff]
  %v12 = vld [vmem:[%s1] sm:$0xff]
  %v13 = vld [vmem:[%s1 + $0x8] sm:$0xff]
  %v14 = vld [vmem:[%s1 + $0x10] sm:$0xff]
  %v15 = vld [vmem:[%s1 + $0x18] sm:$0xff]
  %v16 = vld [vmem:[%s1 + $0x20] sm:$0xff]
  %v17 = vld [vmem:[%s1 + $0x28] sm:$0xff]
  %v18 = vld [vmem:[%s1 + $0x30] sm:$0xff]
  %v19 = vld [vmem:[%s1 + $0x38] sm:$0xff]
  %v20 = vld [vmem:[%s1 + $0x40] sm:$0x1]
  %v21 = vld [vmem:[%s1 + $0x48] sm:$0x1]
  %v22 = vld [vmem:[%s1 + $0x50] sm:$0x1]
  %v23 = vld [vmem:[%s1 + $0x58] sm:$0x1]
  %vm24 = vcmask 138240
  %v26 = vsel %vm24, %v11, 0
  %vm28 = vcmask 1040384
  %v30 = vsel %vm28, %v20, 0
  %v33 = vsel %vm28, %v21, 0
  %v36 = vsel %vm28, %v22, 0
  %v39 = vsel %vm28, %v23, 0
  %41 = vmatprep.subr.mxu0 %v13
  %42 = vmatpush1.msra.mxu0 %v12
  %43 = vmatprep.subr.mxu0 %v17
  %44 = vmatpush1.msra.mxu0 %v16
  %45 = vmatprep.subr.mxu0 %v33
  %46 = vmatpush1.msra.mxu0 %v30
  %47 = vmatprep.subr.mxu0 0.0
  %48 = vmatpush1.msra.mxu0 0.0
  %49 = vmatprep.subr.mxu0 0.0
  %50 = vmatpush1.msra.mxu0 0.0
  %51 = vmatprep.subr.mxu0 0.0
  %52 = vmatpush1.msra.mxu0 0.0
  %53 = vmatprep.subr.mxu0 0.0
  %54 = vmatpush1.msra.mxu0 0.0
  %55 = vmatprep.subr.mxu0 0.0
  %56 = vmatpush1.msra.mxu0 0.0
  %57 = vmatprep.subr.mxu0 0.0
  %58 = vmatpush1.msra.mxu0 0.0
  %59 = vmatprep.subr.mxu0 0.0
  %60 = vmatpush1.msra.mxu0 0.0
  %61 = vmatprep.subr.mxu0 0.0
  %62 = vmatpush1.msra.mxu0 0.0
  %63 = vmatprep.subr.mxu0 0.0
  %64 = vmatpush1.msra.mxu0 0.0
  %65 = vmatprep.subr.mxu0 0.0
  %66 = vmatpush1.msra.mxu0 0.0
  %67 = vmatprep.subr.mxu0 0.0
  %68 = vmatpush1.msra.mxu0 0.0
  %69 = vmatprep.subr.mxu0 0.0
  %70 = vmatpush1.msra.mxu0 0.0
  %71 = vmatprep.subr.mxu0 0.0
  %72 = vmatpush1.msra.mxu0 0.0
  %73 = vmatprep.subr.mxu0 0.0
  %74 = vmatpush1.msra.mxu0 0.0
  %75 = vmatprep.subr.mxu0 0.0
  %76 = vmatpush1.msra.mxu0 0.0
  %77 = vmatprep.subr.mxu0 0.0
  %78 = vmatpush1.msra.mxu0 0.0
  %79 = vmatprep.subr.mxu0 0.0
  %80 = vmatpush1.msra.mxu0 0.0
  %81 = vmatprep.subr.mxu0 0.0
  %82 = vmatpush1.msra.mxu0 0.0
  %83 = vmatprep.subr.mxu0 0.0
  %84 = vmatpush1.msra.mxu0 0.0
  %85 = vmatprep.subr.mxu0 0.0
  %86 = vmatpush1.msra.mxu0 0.0
  %87 = vmatprep.subr.mxu0 0.0
  %88 = vmatpush1.msra.mxu0 0.0
  %89 = vmatprep.subr.mxu0 0.0
  %90 = vmatpush1.msra.mxu0 0.0
  %91 = vmatprep.subr.mxu0 0.0
  %92 = vmatpush1.msra.mxu0 0.0
  %93 = vmatprep.subr.mxu0 0.0
  %94 = vmatpush1.msra.mxu0 0.0
  %95 = vmatprep.subr.mxu0 0.0
  %96 = vmatpush1.msra.mxu0 0.0
  %97 = vmatprep.subr.mxu0 0.0
  %98 = vmatpush1.msra.mxu0 0.0
  %99 = vmatprep.subr.mxu0 0.0
  %100 = vmatpush1.msra.mxu0 0.0
  %101 = vmatprep.subr.mxu0 0.0
  %102 = vmatpush1.msra.mxu0 0.0
  %103 = vmatprep.subr.mxu0 0.0
  %104 = vmatpush1.msra.mxu0 0.0
  %105 = vmatprep.mubr.f32.mxu0 0.0
  %106 = vmatmul.mubr.f32.gmra.mrb[0].mxu0 %v26
  %v107 = vpop.f32.mrb[0].mxu0
  %v108 = vadd.f32 0.0, %v107
  %v109 = vpop.f32.mrb[0].mxu0
  %v110 = vadd.f32 0.0, %v109
  %111 = vdwg.mxu0
  %112 = vmatprep.subr.mxu0 %v15
  %113 = vmatpush1.msra.mxu0 %v14
  %114 = vmatprep.subr.mxu0 %v19
  %115 = vmatpush1.msra.mxu0 %v18
  %116 = vmatprep.subr.mxu0 %v39
  %117 = vmatpush1.msra.mxu0 %v36
  %118 = vmatprep.subr.mxu0 0.0
  %119 = vmatpush1.msra.mxu0 0.0
  %120 = vmatprep.subr.mxu0 0.0
  %121 = vmatpush1.msra.mxu0 0.0
  %122 = vmatprep.subr.mxu0 0.0
  %123 = vmatpush1.msra.mxu0 0.0
  %124 = vmatprep.subr.mxu0 0.0
  %125 = vmatpush1.msra.mxu0 0.0
  %126 = vmatprep.subr.mxu0 0.0
  %127 = vmatpush1.msra.mxu0 0.0
  %128 = vmatprep.subr.mxu0 0.0
  %129 = vmatpush1.msra.mxu0 0.0
  %130 = vmatprep.subr.mxu0 0.0
  %131 = vmatpush1.msra.mxu0 0.0
  %132 = vmatprep.subr.mxu0 0.0
  %133 = vmatpush1.msra.mxu0 0.0
  %134 = vmatprep.subr.mxu0 0.0
  %135 = vmatpush1.msra.mxu0 0.0
  %136 = vmatprep.subr.mxu0 0.0
  %137 = vmatpush1.msra.mxu0 0.0
  %138 = vmatprep.subr.mxu0 0.0
  %139 = vmatpush1.msra.mxu0 0.0
  %140 = vmatprep.subr.mxu0 0.0
  %141 = vmatpush1.msra.mxu0 0.0
  %142 = vmatprep.subr.mxu0 0.0
  %143 = vmatpush1.msra.mxu0 0.0
  %144 = vmatprep.subr.mxu0 0.0
  %145 = vmatpush1.msra.mxu0 0.0
  %146 = vmatprep.subr.mxu0 0.0
  %147 = vmatpush1.msra.mxu0 0.0
  %148 = vmatprep.subr.mxu0 0.0
  %149 = vmatpush1.msra.mxu0 0.0
  %150 = vmatprep.subr.mxu0 0.0
  %151 = vmatpush1.msra.mxu0 0.0
  %152 = vmatprep.subr.mxu0 0.0
  %153 = vmatpush1.msra.mxu0 0.0
  %154 = vmatprep.subr.mxu0 0.0
  %155 = vmatpush1.msra.mxu0 0.0
  %156 = vmatprep.subr.mxu0 0.0
  %157 = vmatpush1.msra.mxu0 0.0
  %158 = vmatprep.subr.mxu0 0.0
  %159 = vmatpush1.msra.mxu0 0.0
  %160 = vmatprep.subr.mxu0 0.0
  %161 = vmatpush1.msra.mxu0 0.0
  %162 = vmatprep.subr.mxu0 0.0
  %163 = vmatpush1.msra.mxu0 0.0
  %164 = vmatprep.subr.mxu0 0.0
  %165 = vmatpush1.msra.mxu0 0.0
  %166 = vmatprep.subr.mxu0 0.0
  %167 = vmatpush1.msra.mxu0 0.0
  %168 = vmatprep.subr.mxu0 0.0
  %169 = vmatpush1.msra.mxu0 0.0
  %170 = vmatprep.subr.mxu0 0.0
  %171 = vmatpush1.msra.mxu0 0.0
  %172 = vmatprep.subr.mxu0 0.0
  %173 = vmatpush1.msra.mxu0 0.0
  %174 = vmatprep.subr.mxu0 0.0
  %175 = vmatpush1.msra.mxu0 0.0
  %176 = vmatprep.mubr.f32.mxu0 0.0
  %177 = vmatmul.mubr.f32.gmra.mrb[0].mxu0 %v26
  %v178 = vpop.f32.mrb[0].mxu0
  %v179 = vadd.f32 0.0, %v178
  %v180 = vpop.f32.mrb[0].mxu0
  %v181 = vadd.f32 0.0, %v180
  %182 = vdwg.mxu0
  %183 = vst [vmem:[%s2] sm:$0xff] %v108
  %184 = vst [vmem:[%s2 + $0x8] sm:$0xff] %v110
  %185 = vst [vmem:[%s2 + $0x10] sm:$0xff] %v179
  %186 = vst [vmem:[%s2 + $0x18] sm:$0xff] %v181
  // Predicated region
  $region10: #{_lambda_.1} parent=0 // pred_check
    _
  $region11: #{_lambda_.1} parent=0 // pred_check_branch
    %188 = sbr.rel (0) target = $region13
  $region12: #{_lambda_.1} parent=0 // pred_region
    _
  $region13: #{_lambda_.1} parent=0 // pred_fallthru
    _
  // Predicated region
  $region14: #{_lambda_.1} parent=0 // pred_check
    _
  $region15: #{_lambda_.1} parent=0 // pred_check_branch
    %190 = sbr.rel (0) target = $region17
  $region16: #{_lambda_.1} parent=0 // pred_region
    _
  $region17: #{_lambda_.1} parent=0 // pred_fallthru
    _

</llo_original>
